<compile_context>
chip_gen: v7x
topology: tpu7x:2x2x1
jax: 0.10.0
libtpu: 0.0.40
codegen_flags: <defaults>
</compile_context>

<pallas_src>
import functools
import math

import jax
import jax.numpy as jnp
from jax.experimental import pallas as pl
from jax.experimental.pallas import tpu as pltpu

LANES = 128
SUBLANES = 8
CHUNK_ROWS = 256          # rows per in-kernel accumulation sub-chunk


def _device_kind():
    try:
        return jax.devices()[0].device_kind.lower()
    except Exception:
        return ""


def _num_tensorcores(kind):
    # 2 TensorCores share HBM on v4 / v5p (megacore) and on TPU7x.
    return 2 if any(t in kind for t in ("v4", "v5p", "v7", "7x")) else 1


def _default_tile_bytes(kind):
    # v5e: stay at 4 MiB tiles (8 MiB double-buffered); everything newer gets
    # 8 MiB tiles (16 MiB double-buffered) to amortise the ~0.35us/step grid
    # overhead.  vmem_limit_bytes is raised accordingly below.
    if ("v5 lite" in kind) or ("v5e" in kind) or ("v5litepod" in kind):
        return 4 << 20
    return 8 << 20


def _kl_sum_kernel(x_ref, out_ref, acc_ref, *, rows, block_rows, chunk,
                   num_chunks, rem, acc_sub, needs_mask):
    """Accumulate sum(mu^2 + exp(2*logstd) - 2*logstd) over this core's blocks."""
    c = pl.program_id(0)            # core-split index (may be size 1)
    i = pl.program_id(1)            # reduction step within this core
    nsteps = pl.num_programs(1)
    lanes = x_ref.shape[-1]

    @pl.when(i == 0)
    def _():
        acc_ref[...] = jnp.zeros_like(acc_ref)

    block_start = (c * nsteps + i) * block_rows   # logical row offset of block

    def accumulate(r0, size, masked):
        mu = x_ref[0, pl.ds(r0, size), :].astype(jnp.float32)
        two_ls = 2.0 * x_ref[1, pl.ds(r0, size), :].astype(jnp.float32)
        # Unnormalised per-element KL term; 0.5 scale and -0.5 constant are
        # applied once in the wrapper epilogue (saves ~2 VALU ops / element).
        v = mu * mu + jnp.exp(two_ls) - two_ls
        if masked:
            row = jax.lax.broadcasted_iota(jnp.int32, v.shape, 0)
            v = jnp.where(row + (block_start + r0) < rows, v, 0.0)
        if acc_sub == SUBLANES:
            # (size, lanes) -> (size//8, 8, lanes); reducing the major axis is
            # pure VPU vreg adds (no per-step XLU reduce).
            acc_ref[...] += v.reshape(-1, SUBLANES, lanes).sum(axis=0)
        else:
            acc_ref[...] += v.sum(axis=0, keepdims=True)

    def run_block(masked):
        if num_chunks == 1:
            accumulate(0, chunk, masked)
        else:
            def body(k, carry):
                accumulate(pl.multiple_of(k * chunk, chunk), chunk, masked)
                return carry
            jax.lax.fori_loop(0, num_chunks, body, 0,
                              unroll=(num_chunks <= 8))
        if rem:
            # Static-size remainder chunk (only in single-block configs).
            accumulate(num_chunks * chunk, rem, masked)

    if needs_mask:
        # Only tail / clamped-duplicate blocks pay the iota+where mask.
        is_tail = block_start + block_rows > rows

        @pl.when(is_tail)
        def _():
            run_block(True)

        @pl.when(jnp.logical_not(is_tail))
        def _():
            run_block(False)
    else:
        run_block(False)

    @pl.when(i == nsteps - 1)
    def _():
        out_ref[0] = acc_ref[...]     # per-core, per-lane partial sums


def kl_divergence_loss(kl, *, target_tile_bytes=None, num_cores=None,
                       use_core_parallel=False):
    """Pallas implementation of KLDivergenceLoss.forward. Returns a scalar f32.

    `kl` stacks mu = kl[0] and logstd = kl[1] along axis 0 (any trailing shape,
    any float dtype; low-precision inputs are upcast in-kernel).
    """
    kl = jnp.asarray(kl)
    if kl.ndim < 2 or kl.shape[0] != 2:
        raise ValueError("kl must stack [mu, logstd] along axis 0 (shape[0]==2)")
    n = math.prod(kl.shape[1:])            # elements per component

    kind = _device_kind()
    if num_cores is None:
        num_cores = _num_tensorcores(kind)
    if target_tile_bytes is None:
        target_tile_bytes = _default_tile_bytes(kind)

    # Zero-copy view of kl — no host-side jnp.pad copy.
    if n % LANES == 0:
        lanes = LANES                      # dense, lane-aligned view
    else:
        lanes = kl.shape[-1]               # natural trailing dim as lanes
    rows = n // lanes
    x = kl.reshape(2, rows, lanes)
    # TODO(synk): if the caller's kl is non-contiguous this reshape may insert
    # one XLA copy before the pallas_call; nothing to do in-kernel about that.

    itemsize = jnp.dtype(kl.dtype).itemsize
    lanes_padded = -(-lanes // LANES) * LANES
    bytes_per_row = 2 * lanes_padded * itemsize        # VMEM footprint per row
    block_rows = max(CHUNK_ROWS,
                     (int(target_tile_bytes) // bytes_per_row)
                     // CHUNK_ROWS * CHUNK_ROWS)

    if rows <= block_rows:
        block_rows = rows                               # single block
        num_chunks, rem = divmod(rows, CHUNK_ROWS)
        chunk = CHUNK_ROWS
        if num_chunks == 0:
            num_chunks, chunk, rem = 1, rows, 0
    else:
        chunk, rem = CHUNK_ROWS, 0
        num_chunks = block_rows // CHUNK_ROWS

    total_blocks = -(-rows // block_rows)
    nc = num_cores if (num_cores > 1 and total_blocks > 1) else 1
    steps = -(-total_blocks // nc)
    needs_mask = (nc * steps * block_rows) != rows
    acc_sub = SUBLANES if (lanes == LANES and chunk % SUBLANES == 0
                           and rem % SUBLANES == 0) else 1

    if nc * steps == total_blocks:
        in_index = lambda c, i: (0, c * steps + i, 0)
    else:
        # Odd block count on a 2-core split: the last logical block of core 1
        # starts past the array; clamp its DMA (the in-kernel mask zeroes it).
        in_index = lambda c, i: (0, jnp.minimum(c * steps + i,
                                                total_blocks - 1), 0)

    tile_bytes = 2 * block_rows * lanes_padded * itemsize
    # 2x for double buffering + headroom for chunk-sized f32 temporaries and
    # the accumulator; capped well under v7x's 64 MiB physical VMEM.
    vmem_limit = int(min(2 * tile_bytes + (16 << 20), 48 << 20))

    kernel = functools.partial(
        _kl_sum_kernel, rows=rows, block_rows=block_rows, chunk=chunk,
        num_chunks=num_chunks, rem=rem, acc_sub=acc_sub, needs_mask=needs_mask)

    # Axis 0 splits the reduction across TensorCores on 2-TC chips.  If plain
    # PARALLEL does not shard on a given target, opt in to CORE_PARALLEL.
    if nc > 1 and use_core_parallel:
        axis0 = pltpu.CORE_PARALLEL
    else:
        axis0 = pltpu.PARALLEL

    partials = pl.pallas_call(
        kernel,
        out_shape=jax.ShapeDtypeStruct((nc, acc_sub, lanes), jnp.float32),
        grid_spec=pltpu.PrefetchScalarGridSpec(
            num_scalar_prefetch=0,
            grid=(nc, steps),
            in_specs=[pl.BlockSpec((2, block_rows, lanes), in_index)],
            out_specs=pl.BlockSpec((1, acc_sub, lanes), lambda c, i: (c, 0, 0)),
            scratch_shapes=[pltpu.VMEM((acc_sub, lanes), jnp.float32)],
        ),
        compiler_params=pltpu.CompilerParams(
            dimension_semantics=(axis0, pltpu.ARBITRARY),
            vmem_limit_bytes=vmem_limit),
    )(x)

    # Tiny epilogue: combine per-core per-lane partials and apply the 0.5
    # scale / -0.5 constant exactly once.
    total = jnp.sum(partials)
    return 0.5 * total / n - 0.5


def _reference(kl):
    mu = kl[0].astype(jnp.float32)
    logstd = kl[1].astype(jnp.float32)
    term = -0.5 - logstd + 0.5 * mu ** 2 + 0.5 * jnp.exp(2.0 * logstd)
    return jnp.mean(term, axis=-1).mean()


if __name__ == "__main__":
    key = jax.random.PRNGKey(0)
    keys = jax.random.split(key, 7)
    cases = [
        # (shape, dtype, kwargs)
        ((2, 4, 16, 16), jnp.float32, {}),                       # aligned, 1 block
        ((2, 2, 8, 32), jnp.float32, {}),                        # aligned, tiny rows
        ((2, 5, 128, 128), jnp.float32,                          # multi-block, 2-way
         dict(target_tile_bytes=256 << 10, num_cores=2)),        # split + clamp + mask
        ((2, 3, 200, 128), jnp.float32,                          # multi-block, 1 core,
         dict(target_tile_bytes=256 << 10, num_cores=1)),        # partial tail block
        ((2, 3, 5, 7), jnp.float32, {}),                         # lane-unaligned (no pad)
        ((2, 5, 100, 33), jnp.float32, {}),                      # unaligned + chunk rem
        ((2, 4, 16, 16), jnp.bfloat16, {}),                      # bf16 input path
    ]
    ok = True
    for k, (shape, dtype, kwargs) in zip(keys, cases):
        kl = jax.random.normal(k, shape, dtype=jnp.float32).astype(dtype)
        got = jax.block_until_ready(kl_divergence_loss(kl, **kwargs))
        want = jax.block_until_ready(_reference(kl))
        tol = 1e-2 if dtype == jnp.bfloat16 else 2e-4
        if not jnp.allclose(got, want, rtol=tol, atol=1e-5):
            ok = False
            print(f"MISMATCH shape={shape} dtype={dtype}: {got} vs {want}")
    if ok:
        print("KERNEL_OK")
</pallas_src>

<mosaic_0001>
module attributes {stable_mosaic.version = 11 : i64} {
  func.func @_kl_sum_kernel(%arg0: i32, %arg1: i32, %arg2: memref<2x8x128xf32, #tpu.memory_space<vmem>>, %arg3: memref<1x8x128xf32, #tpu.memory_space<vmem>>, %arg4: memref<8x128xf32, #tpu.memory_space<vmem>>) attributes {dimension_semantics = [#tpu.dimension_semantics<parallel>, #tpu.dimension_semantics<arbitrary>], iteration_bounds = array<i64: 1, 1>, scalar_prefetch = 0 : i64, scratch_operands = 1 : i64, tpu.core_type = #tpu.core_type<tc>, window_params = [{transform_indices = @transform_0, window_bounds = array<i64: 2, 8, 128>}, {transform_indices = @transform_1, window_bounds = array<i64: 1, 8, 128>}]} {
    %c0_i32 = arith.constant 0 : i32
    %0 = arith.cmpi eq, %arg1, %c0_i32 : i32
    %1 = arith.extui %0 : i1 to i32
    %c0_i32_0 = arith.constant 0 : i32
    %2 = arith.cmpi ne, %1, %c0_i32_0 : i32
    scf.if %2 {
      %cst_12 = arith.constant 0.000000e+00 : f32
      %21 = vector.broadcast %cst_12 : f32 to vector<8x128xf32>
      %c0_13 = arith.constant 0 : index
      %c0_14 = arith.constant 0 : index
      %22 = vector.load %arg4[%c0_13, %c0_14] : memref<8x128xf32, #tpu.memory_space<vmem>>, vector<8x128xf32>
      tpu.vector_store %arg4[%c0_13, %c0_14], %21 {strides = array<i32>} : memref<8x128xf32, #tpu.memory_space<vmem>>, vector<8x128xf32>,
    } else {
    }
    %c0 = arith.constant 0 : index
    %c0_1 = arith.constant 0 : index
    %c0_2 = arith.constant 0 : index
    %3 = vector.load %arg2[%c0, %c0_1, %c0_2] : memref<2x8x128xf32, #tpu.memory_space<vmem>>, vector<1x8x128xf32>
    %4 = vector.shape_cast %3 : vector<1x8x128xf32> to vector<8x128xf32>
    %c1 = arith.constant 1 : index
    %c0_3 = arith.constant 0 : index
    %c0_4 = arith.constant 0 : index
    %5 = vector.load %arg2[%c1, %c0_3, %c0_4] : memref<2x8x128xf32, #tpu.memory_space<vmem>>, vector<1x8x128xf32>
    %6 = vector.shape_cast %5 : vector<1x8x128xf32> to vector<8x128xf32>
    %cst = arith.constant 2.000000e+00 : f32
    %7 = vector.broadcast %cst : f32 to vector<8x128xf32>
    %8 = arith.mulf %7, %6 : vector<8x128xf32>
    %9 = arith.mulf %4, %4 : vector<8x128xf32>
    %10 = math.exp %8 : vector<8x128xf32>
    %11 = arith.addf %9, %10 : vector<8x128xf32>
    %12 = arith.subf %11, %8 : vector<8x128xf32>
    %c0_5 = arith.constant 0 : index
    %c0_6 = arith.constant 0 : index
    %13 = vector.load %arg4[%c0_5, %c0_6] : memref<8x128xf32, #tpu.memory_space<vmem>>, vector<8x128xf32>
    %14 = vector.shape_cast %12 : vector<8x128xf32> to vector<1x8x128xf32>
    %cst_7 = arith.constant dense<0.000000e+00> : vector<8x128xf32>
    %15 = vector.multi_reduction <add>, %14, %cst_7 [0] : vector<1x8x128xf32> to vector<8x128xf32>
    %16 = arith.addf %13, %15 : vector<8x128xf32>
    %c0_8 = arith.constant 0 : index
    %c0_9 = arith.constant 0 : index
    %17 = vector.load %arg4[%c0_8, %c0_9] : memref<8x128xf32, #tpu.memory_space<vmem>>, vector<8x128xf32>
    tpu.vector_store %arg4[%c0_8, %c0_9], %16 {strides = array<i32>} : memref<8x128xf32, #tpu.memory_space<vmem>>, vector<8x128xf32>,
    %c0_i32_10 = arith.constant 0 : i32
    %18 = arith.cmpi eq, %arg1, %c0_i32_10 : i32
    %19 = arith.extui %18 : i1 to i32
    %c0_i32_11 = arith.constant 0 : i32
    %20 = arith.cmpi ne, %19, %c0_i32_11 : i32
    scf.if %20 {
      %c0_12 = arith.constant 0 : index
      %c0_13 = arith.constant 0 : index
      %21 = vector.load %arg4[%c0_12, %c0_13] : memref<8x128xf32, #tpu.memory_space<vmem>>, vector<8x128xf32>
      %c0_14 = arith.constant 0 : index
      %c0_15 = arith.constant 0 : index
      %c0_16 = arith.constant 0 : index
      %22 = vector.load %arg3[%c0_14, %c0_15, %c0_16] : memref<1x8x128xf32, #tpu.memory_space<vmem>>, vector<1x8x128xf32>
      %23 = vector.shape_cast %22 : vector<1x8x128xf32> to vector<8x128xf32>
      %24 = vector.shape_cast %21 : vector<8x128xf32> to vector<1x8x128xf32>
      tpu.vector_store %arg3[%c0_14, %c0_15, %c0_16], %24 {strides = array<i32>} : memref<1x8x128xf32, #tpu.memory_space<vmem>>, vector<1x8x128xf32>,
    } else {
    }
    return
  }
  func.func @transform_0(%arg0: i32, %arg1: i32) -> (i32, i32, i32) {
    %c1_i32 = arith.constant 1 : i32
    %0 = arith.muli %arg0, %c1_i32 : i32
    %1 = arith.addi %0, %arg1 : i32
    %c0_i32 = arith.constant 0 : i32
    %c0_i32_0 = arith.constant 0 : i32
    %c0_i32_1 = arith.constant 0 : i32
    return %c0_i32, %1, %c0_i32_0 : i32, i32, i32
  }
  func.func @transform_1(%arg0: i32, %arg1: i32) -> (i32, i32, i32) {
    %c0_i32 = arith.constant 0 : i32
    %c0_i32_0 = arith.constant 0 : i32
    %c0_i32_1 = arith.constant 0 : i32
    return %arg0, %c0_i32, %c0_i32_0 : i32, i32, i32
  }
}

</mosaic_0001>

<llo_original>
// kernel: tpu_custom_call.1
$region0: #{tpu_custom_call.1}
  #allocation0 [shape = 'u32[]', space=smem, size = 0x4, offset = 0x4, fixed_abs, tag = 'smem constant byte address 0x4 - core index']
  #allocation1 [shape = 'u32[144,128]{1,0:T(1,128)}', space=vmem, size = 0x12000, scoped, tag = 'internal scratch']
  #allocation2 [shape = 'f32[8,128]{1,0:T(8,128)}', space=vmem, size = 0x1000, scoped, tag = 'scratch operand']
  %s0 = inlined_call_operand.hbm [shape: f32[2,8,128], index: 0, kind: input, shape index: {}]
  %s1 = inlined_call_operand.hbm [shape: f32[1,8,128], index: 1, kind: output, shape index: {}]
  %s2 = sld [smem:[#allocation0]]
  $region26: #{tpu_custom_call.1} parent=0
    _
  %s4 = ssub.s32 1, %s2
  %s5 = scalar_select 0, %s4, %s2
  $region1: #{tpu_custom_call.1} parent=0
    #allocation3 [shape = 'u8[8192]{0}', space=vmem, size = 0x2000, scoped, tag = 'input window, operand 0, single buffered']
    #allocation4 [shape = 's32[1]{0}', space=sflag, size = 0x4, scoped, tag = 'scoped memory for tpu_custom_call.1']
    #allocation5 [shape = 's32[1]{0}', space=sflag, size = 0x4, scoped, tag = 'scoped memory for tpu_custom_call.1']
    #allocation6 [shape = 'u8[4096]{0}', space=vmem, size = 0x1000, scoped, tag = 'output window, operand 0, single buffered']
    %6 = vsyncpa [#allocation4], 0
    %7 = vsyncpa [#allocation5], 0
    // Predicated region
    $region2: #{tpu_custom_call.1} parent=1 // pred_check
      _
    $region3: #{tpu_custom_call.1} parent=1 // pred_check_branch
      %9 = sbr.rel (0) target = $region5
    $region4: #{tpu_custom_call.1} parent=1 // pred_region
      %s10 = sadd.s32 0, 0
      %s12 = ssub.s32 256, 256
      %13 = vsyncadd [#allocation4], %s12
      %s14 = smul.addr %s10, 128
      %s15 = scalar_lea.hbm %s0, %s14
      %s16 = sshll.u32 [#allocation3], 4
      %s17 = int_to_ptr.vmem [resolvable:$true] %s16
      %22 = dma.hbm_to_vmem [thread:$0]  %s15, 256, %s17, [#allocation4], 128, 128, 8
    $region5: #{tpu_custom_call.1} parent=1 // pred_fallthru
      _
    // Predicated region
    $region6: #{tpu_custom_call.1} parent=1 // pred_check
      _
    $region7: #{tpu_custom_call.1} parent=1 // pred_check_branch
      %24 = sbr.rel (0) target = $region9
    $region8: #{tpu_custom_call.1} parent=1 // pred_region
      %25 = dma.done [#allocation4], 256
    $region9: #{tpu_custom_call.1} parent=1 // pred_fallthru
      _
    %s26 = sadd.s32 0, 0
    %p27 = scmp.eq.s32.totalorder 0, 0
    // Predicated region
    $region10: #{tpu_custom_call.1} parent=1 // pred_check
      %p28 = pneg %p27
    $region11: #{tpu_custom_call.1} parent=1 // pred_check_branch
      %30 = sbr.rel (%p28) target = $region13
    $region12: #{tpu_custom_call.1} parent=1 // pred_region
      %31 = vst [vmem:[#allocation2] sm:$0xff] 0.0
    $region13: #{tpu_custom_call.1} parent=1 // pred_fallthru
      _
    %v32 = vld [vmem:[#allocation3] sm:$0xff]
    %s33 = scalar_lea.vmem [#allocation3], 8
    %v34 = vld [vmem:[%s33] sm:$0xff]
    %v35 = vmul.f32 %v34, 2.0
    %v36 = vmul.f32 %v32, %v32
    %v37 = vmul.f32 %v35, 1.442695
    %v38 = vpow.pop %v37
    %v39 = vadd.f32 %v36, %v38
    %v40 = vsub.f32 %v39, %v35
    %v41 = vld [vmem:[#allocation2] sm:$0xff]
    %v42 = vadd.f32 %v40, 0.0
    %v43 = vadd.f32 %v41, %v42
    %44 = vst [vmem:[#allocation2] sm:$0xff] %v43
    // Predicated region
    $region14: #{tpu_custom_call.1} parent=1 // pred_check
      %p45 = pneg %p27
    $region15: #{tpu_custom_call.1} parent=1 // pred_check_branch
      %47 = sbr.rel (%p45) target = $region17
    $region16: #{tpu_custom_call.1} parent=1 // pred_region
      %v48 = vld [vmem:[#allocation2] sm:$0xff]
      %49 = vst [vmem:[#allocation6] sm:$0xff] %v48
    $region17: #{tpu_custom_call.1} parent=1 // pred_fallthru
      _
    // Predicated region
    $region18: #{tpu_custom_call.1} parent=1 // pred_check
      _
    $region19: #{tpu_custom_call.1} parent=1 // pred_check_branch
      %51 = sbr.rel (0) target = $region21
    $region20: #{tpu_custom_call.1} parent=1 // pred_region
      %s53 = ssub.s32 128, 128
      %54 = vsyncadd [#allocation5], %s53
      %s56 = sshll.u32 [#allocation6], 4
      %s57 = int_to_ptr.vmem [resolvable:$true] %s56
      %59 = dma.vmem_to_hbm [thread:$0]  %s57, 128, %s1, [#allocation5]
    $region21: #{tpu_custom_call.1} parent=1 // pred_fallthru
      _
    // Predicated region
    $region22: #{tpu_custom_call.1} parent=1 // pred_check
      _
    $region23: #{tpu_custom_call.1} parent=1 // pred_check_branch
      %61 = sbr.rel (0) target = $region25
    $region24: #{tpu_custom_call.1} parent=1 // pred_region
      %62 = dma.done [#allocation5], 128
    $region25: #{tpu_custom_call.1} parent=1 // pred_fallthru
      _
    %63 = vsyncpa [#allocation4], 1
    %64 = vsyncpa [#allocation5], 1

</llo_original>
